<compile_context>
chip_gen: v5e
topology: v5e:2x2
jax: 0.10.0
libtpu: 0.0.40
codegen_flags: <defaults>
</compile_context>

<pallas_src>
import numpy as np
import jax
import jax.numpy as jnp
from jax import lax
from jax.experimental import pallas as pl
from jax.experimental.pallas import tpu as pltpu


def _round_up(v, m):
    return ((v + m - 1) // m) * m


def _pick_batch_tile(N, L):
    """Largest divisor of N whose chunk is <= 512 data lanes; prefer >= 2
    chunks (v7x megacore) when each chunk still keeps >= 128 data lanes."""
    divs = [d for d in range(1, N + 1) if N % d == 0]
    cands = [d for d in divs if d * L <= 512] or [1]
    nb = max(cands)
    split = [d for d in cands if N // d >= 2 and d * L >= 128]
    if split:
        nb = max(split)
    return nb


def _make_dense_block_kernel(NB, L, C_in, G, num_layers, C_pad_in, G_pad, W):
    """Fused DenseBlock kernel for one batch chunk of NB examples."""
    INV_SQRT2 = 0.7071067811865476

    def kernel(x_ref, ss_ref, w_ref, b_ref, out_ref, work_ref):
        # ---- scatter input (NB, C_in, L) into the lane-dense f32 work buffer
        if C_pad_in > C_in:      # zero the padded input channels (sublane pad)
            work_ref[C_in:C_pad_in, :] = jnp.zeros((C_pad_in - C_in, W),
                                                   jnp.float32)
        for n in range(NB):
            work_ref[0:C_in, n * L:(n + 1) * L] = x_ref[n].astype(jnp.float32)

        # Segment-boundary masks, built once (reused every layer).
        col = lax.broadcasted_iota(jnp.int32, (1, W), 1)
        m_prev = (col % L) != 0          # left neighbour exists in-segment
        m_next = (col % L) != (L - 1)    # right neighbour exists in-segment

        for k in range(num_layers):      # static Python loop — fully unrolled
            c = C_pad_in + k * G_pad     # padded in-channel count of layer k

            # Folded BatchNorm1d + exact (erf) GELU on all channels so far.
            a = work_ref[0:c, :]
            scale = ss_ref[0:c, 2 * k:2 * k + 1]
            shift = ss_ref[0:c, 2 * k + 1:2 * k + 2]
            a = scale * a + shift
            a = 0.5 * a * (1.0 + lax.erf(a * INV_SQRT2))

            # k=3 conv as three MXU matmuls on rolled taps; where-masks give
            # the zero padding at batch-segment edges (positive rolls only,
            # and the where() kills any wraparound / dead-lane garbage).
            a_prev = jnp.where(m_prev, pltpu.roll(a, shift=1, axis=1), 0.0)
            a_next = jnp.where(m_next, pltpu.roll(a, shift=W - 1, axis=1), 0.0)

            w0 = w_ref[(3 * k + 0) * G_pad:(3 * k + 1) * G_pad, 0:c]
            w1 = w_ref[(3 * k + 1) * G_pad:(3 * k + 2) * G_pad, 0:c]
            w2 = w_ref[(3 * k + 2) * G_pad:(3 * k + 3) * G_pad, 0:c]
            bias = b_ref[k * G_pad:(k + 1) * G_pad, 0:1]

            y = (jnp.dot(w0, a_prev, preferred_element_type=jnp.float32)
                 + jnp.dot(w1, a, preferred_element_type=jnp.float32)
                 + jnp.dot(w2, a_next, preferred_element_type=jnp.float32)
                 + bias)

            # Full-width, sublane-aligned store of the new channel group.
            row0 = C_pad_in + k * G_pad
            work_ref[row0:row0 + G_pad, :] = y

        # ---- gather back to the natural (NB, C_final, L) output layout.
        for n in range(NB):
            seg = slice(n * L, (n + 1) * L)
            out_ref[n, 0:C_in, :] = work_ref[0:C_in, seg].astype(out_ref.dtype)
            for k in range(num_layers):
                src0 = C_pad_in + k * G_pad
                dst0 = C_in + k * G
                out_ref[n, dst0:dst0 + G, :] = (
                    work_ref[src0:src0 + G, seg].astype(out_ref.dtype))

    return kernel


def _pack_dense_block_params(params, C_in, G, num_layers, eps):
    """Fold BN (eval mode) and pack all layer params into 3 padded slabs."""
    C_pad_in = _round_up(C_in, 8)
    G_pad = _round_up(G, 8)
    C_max_pad = C_pad_in + (num_layers - 1) * G_pad

    def pad_pos(r):                      # real channel index -> padded row
        if r < C_in:
            return r
        j, w = divmod(r - C_in, G)
        return C_pad_in + j * G_pad + w

    ss = jnp.zeros((C_max_pad, 2 * num_layers), jnp.float32)
    w_slab = jnp.zeros((num_layers * 3 * G_pad, C_max_pad), jnp.float32)
    b_slab = jnp.zeros((num_layers * G_pad, 1), jnp.float32)

    c_real = C_in
    for k, p in enumerate(params):
        idx = np.array([pad_pos(r) for r in range(c_real)], dtype=np.int32)
        inv_std = 1.0 / jnp.sqrt(p["var"] + eps)
        scale = p["gamma"] * inv_std
        shift = p["beta"] - p["mean"] * scale
        ss = ss.at[idx, 2 * k].set(scale)
        ss = ss.at[idx, 2 * k + 1].set(shift)
        for t in range(3):               # tap t pairs with x[l - 1 + t]
            r0 = (3 * k + t) * G_pad
            w_slab = w_slab.at[r0:r0 + G, idx].set(p["w"][:, :, t])
        b_slab = b_slab.at[k * G_pad:k * G_pad + G, 0].set(p["b"])
        c_real += G

    return ss, w_slab, b_slab, C_pad_in, G_pad, C_max_pad


def dense_block_forward(x, params, eps=1e-5):
    """Fused Pallas DenseBlock. x: (N, C_in, L) -> (N, C_in + num_layers*G, L)."""
    N, C_in, L = x.shape
    G = params[0]["w"].shape[0]
    num_layers = len(params)
    C_final = C_in + num_layers * G

    ss, w_slab, b_slab, C_pad_in, G_pad, C_max_pad = _pack_dense_block_params(
        params, C_in, G, num_layers, eps)

    NB = _pick_batch_tile(N, L)
    W = _round_up(NB * L, 128)           # lane-dense work-buffer width
    C_work = C_pad_in + num_layers * G_pad

    kernel = _make_dense_block_kernel(NB, L, C_in, G, num_layers,
                                      C_pad_in, G_pad, W)

    out = pl.pallas_call(
        kernel,
        out_shape=jax.ShapeDtypeStruct((N, C_final, L), x.dtype),
        grid=(N // NB,),
        in_specs=[
            pl.BlockSpec((NB, C_in, L), lambda i: (i, 0, 0)),
            pl.BlockSpec((C_max_pad, 2 * num_layers), lambda i: (0, 0)),
            pl.BlockSpec((num_layers * 3 * G_pad, C_max_pad),
                         lambda i: (0, 0)),
            pl.BlockSpec((num_layers * G_pad, 1), lambda i: (0, 0)),
        ],
        out_specs=pl.BlockSpec((NB, C_final, L), lambda i: (i, 0, 0)),
        scratch_shapes=[pltpu.VMEM((C_work, W), jnp.float32)],
        compiler_params=pltpu.CompilerParams(
            dimension_semantics=("parallel",),
            vmem_limit_bytes=48 * 1024 * 1024,   # safe on v5e/v6e/v7x
        ),
    )(x, ss, w_slab, b_slab)
    return out


def init_dense_block_params(key, in_channels, num_layers, growth_rate):
    """Deterministic synthetic parameters mirroring the torch module's shapes."""
    params = []
    C = in_channels
    for _ in range(num_layers):
        key, k_w, k_b = jax.random.split(key, 3)
        ar = jnp.arange(C, dtype=jnp.float32)
        gamma = 1.0 + 0.01 * ar
        beta = 0.02 * ar
        running_mean = 0.05 * jnp.sin(ar)
        running_var = 1.0 + 0.1 * jnp.cos(ar) ** 2
        bound = 1.0 / jnp.sqrt(jnp.float32(C * 3))
        w = jax.random.uniform(k_w, (growth_rate, C, 3), jnp.float32,
                               -bound, bound)
        b = jax.random.uniform(k_b, (growth_rate,), jnp.float32, -bound, bound)
        params.append(dict(gamma=gamma, beta=beta, mean=running_mean,
                           var=running_var, w=w, b=b))
        C += growth_rate
    return params


def dense_block_reference(x, params, eps=1e-5):
    """Pure-JAX reference (matches PyTorch eval-mode forward)."""
    for p in params:
        a = (x - p["mean"][None, :, None]) / jnp.sqrt(
            p["var"][None, :, None] + eps)
        a = a * p["gamma"][None, :, None] + p["beta"][None, :, None]
        a = jax.nn.gelu(a, approximate=False)
        y = lax.conv_general_dilated(a, p["w"], window_strides=(1,),
                                     padding=[(1, 1)],
                                     dimension_numbers=("NCH", "OIH", "NCH"))
        y = y + p["b"][None, :, None]
        x = jnp.concatenate([x, y], axis=1)
    return x


if __name__ == "__main__":
    key = jax.random.PRNGKey(0)
    k_x, k_p = jax.random.split(key)

    N, C_in, L = 2, 4, 16
    num_layers, growth_rate = 3, 8

    x = jax.random.normal(k_x, (N, C_in, L), dtype=jnp.float32)
    params = init_dense_block_params(k_p, C_in, num_layers, growth_rate)

    out = jax.block_until_ready(dense_block_forward(x, params))
    ref = jax.block_until_ready(dense_block_reference(x, params))

    assert out.shape == (N, C_in + num_layers * growth_rate, L), out.shape
    assert jnp.allclose(out, ref, atol=1e-4, rtol=1e-4), \
        float(jnp.max(jnp.abs(out - ref)))

    print("KERNEL_OK")
</pallas_src>

<mosaic_0001>
module attributes {stable_mosaic.version = 11 : i64} {
  func.func @kernel(%arg0: i32, %arg1: memref<2x4x16xf32, #tpu.memory_space<vmem>>, %arg2: memref<24x6xf32, #tpu.memory_space<vmem>>, %arg3: memref<72x24xf32, #tpu.memory_space<vmem>>, %arg4: memref<24x1xf32, #tpu.memory_space<vmem>>, %arg5: memref<2x28x16xf32, #tpu.memory_space<vmem>>, %arg6: memref<32x128xf32, #tpu.memory_space<vmem>>) attributes {dimension_semantics = [#tpu.dimension_semantics<parallel>], iteration_bounds = array<i64: 1>, scalar_prefetch = 0 : i64, scratch_operands = 1 : i64, tpu.core_type = #tpu.core_type<tc>, window_params = [{transform_indices = @transform_0, window_bounds = array<i64: 2, 4, 16>}, {pipeline_mode = #tpu.pipeline_mode<synchronous>, transform_indices = @transform_1, window_bounds = array<i64: 24, 6>}, {pipeline_mode = #tpu.pipeline_mode<synchronous>, transform_indices = @transform_2, window_bounds = array<i64: 72, 24>}, {pipeline_mode = #tpu.pipeline_mode<synchronous>, transform_indices = @transform_3, window_bounds = array<i64: 24, 1>}, {transform_indices = @transform_4, window_bounds = array<i64: 2, 28, 16>}]} {
    %cst = arith.constant 0.000000e+00 : f32
    %0 = vector.broadcast %cst : f32 to vector<4x128xf32>
    %c4 = arith.constant 4 : index
    %c0 = arith.constant 0 : index
    %1 = vector.load %arg6[%c4, %c0] : memref<32x128xf32, #tpu.memory_space<vmem>>, vector<4x128xf32>
    tpu.vector_store %arg6[%c4, %c0], %0 {strides = array<i32>} : memref<32x128xf32, #tpu.memory_space<vmem>>, vector<4x128xf32>,
    %c0_0 = arith.constant 0 : index
    %c0_1 = arith.constant 0 : index
    %c0_2 = arith.constant 0 : index
    %2 = vector.load %arg1[%c0_0, %c0_1, %c0_2] : memref<2x4x16xf32, #tpu.memory_space<vmem>>, vector<1x4x16xf32>
    %3 = vector.shape_cast %2 : vector<1x4x16xf32> to vector<4x16xf32>
    %c0_3 = arith.constant 0 : index
    %c0_4 = arith.constant 0 : index
    %4 = vector.load %arg6[%c0_3, %c0_4] : memref<32x128xf32, #tpu.memory_space<vmem>>, vector<4x16xf32>
    tpu.vector_store %arg6[%c0_3, %c0_4], %3 {strides = array<i32>} : memref<32x128xf32, #tpu.memory_space<vmem>>, vector<4x16xf32>,
    %c1 = arith.constant 1 : index
    %c0_5 = arith.constant 0 : index
    %c0_6 = arith.constant 0 : index
    %5 = vector.load %arg1[%c1, %c0_5, %c0_6] : memref<2x4x16xf32, #tpu.memory_space<vmem>>, vector<1x4x16xf32>
    %6 = vector.shape_cast %5 : vector<1x4x16xf32> to vector<4x16xf32>
    %c0_7 = arith.constant 0 : index
    %c16 = arith.constant 16 : index
    %7 = vector.load %arg6[%c0_7, %c16] : memref<32x128xf32, #tpu.memory_space<vmem>>, vector<4x16xf32>
    tpu.vector_store %arg6[%c0_7, %c16], %6 {strides = array<i32>} : memref<32x128xf32, #tpu.memory_space<vmem>>, vector<4x16xf32>,
    %8 = tpu.iota {dimensions = array<i32: 1>} : vector<1x128xi32>
    %c16_i32 = arith.constant 16 : i32
    %c0_i32 = arith.constant 0 : i32
    %9 = arith.cmpi eq, %c16_i32, %c0_i32 : i32
    %c1_i32 = arith.constant 1 : i32
    %10 = arith.select %9, %c1_i32, %c16_i32 : i32
    %11 = vector.broadcast %10 : i32 to vector<1x128xi32>
    %12 = arith.remsi %8, %11 : vector<1x128xi32>
    %c0_i32_8 = arith.constant 0 : i32
    %13 = vector.broadcast %c0_i32_8 : i32 to vector<1x128xi32>
    %14 = arith.cmpi ne, %12, %13 : vector<1x128xi32>
    %c0_i32_9 = arith.constant 0 : i32
    %15 = vector.broadcast %c0_i32_9 : i32 to vector<1x128xi32>
    %16 = arith.cmpi slt, %12, %15 : vector<1x128xi32>
    %c0_i32_10 = arith.constant 0 : i32
    %17 = arith.cmpi slt, %10, %c0_i32_10 : i32
    %18 = vector.broadcast %17 : i1 to vector<1x128xi1>
    %19 = vector.broadcast %18 : vector<1x128xi1> to vector<1x128xi1>
    %20 = arith.xori %16, %19 : vector<1x128xi1>
    %21 = arith.andi %20, %14 : vector<1x128xi1>
    %22 = vector.broadcast %10 : i32 to vector<1x128xi32>
    %23 = arith.addi %12, %22 : vector<1x128xi32>
    %24 = arith.select %21, %23, %12 : vector<1x128xi1>, vector<1x128xi32>
    %c0_i32_11 = arith.constant 0 : i32
    %25 = vector.broadcast %c0_i32_11 : i32 to vector<1x128xi32>
    %26 = arith.cmpi ne, %24, %25 : vector<1x128xi32>
    %c16_i32_12 = arith.constant 16 : i32
    %c0_i32_13 = arith.constant 0 : i32
    %27 = arith.cmpi eq, %c16_i32_12, %c0_i32_13 : i32
    %c1_i32_14 = arith.constant 1 : i32
    %28 = arith.select %27, %c1_i32_14, %c16_i32_12 : i32
    %29 = vector.broadcast %28 : i32 to vector<1x128xi32>
    %30 = arith.remsi %8, %29 : vector<1x128xi32>
    %c0_i32_15 = arith.constant 0 : i32
    %31 = vector.broadcast %c0_i32_15 : i32 to vector<1x128xi32>
    %32 = arith.cmpi ne, %30, %31 : vector<1x128xi32>
    %c0_i32_16 = arith.constant 0 : i32
    %33 = vector.broadcast %c0_i32_16 : i32 to vector<1x128xi32>
    %34 = arith.cmpi slt, %30, %33 : vector<1x128xi32>
    %c0_i32_17 = arith.constant 0 : i32
    %35 = arith.cmpi slt, %28, %c0_i32_17 : i32
    %36 = vector.broadcast %35 : i1 to vector<1x128xi1>
    %37 = vector.broadcast %36 : vector<1x128xi1> to vector<1x128xi1>
    %38 = arith.xori %34, %37 : vector<1x128xi1>
    %39 = arith.andi %38, %32 : vector<1x128xi1>
    %40 = vector.broadcast %28 : i32 to vector<1x128xi32>
    %41 = arith.addi %30, %40 : vector<1x128xi32>
    %42 = arith.select %39, %41, %30 : vector<1x128xi1>, vector<1x128xi32>
    %c15_i32 = arith.constant 15 : i32
    %43 = vector.broadcast %c15_i32 : i32 to vector<1x128xi32>
    %44 = arith.cmpi ne, %42, %43 : vector<1x128xi32>
    %c0_18 = arith.constant 0 : index
    %c0_19 = arith.constant 0 : index
    %45 = vector.load %arg6[%c0_18, %c0_19] : memref<32x128xf32, #tpu.memory_space<vmem>>, vector<8x128xf32>
    %c0_20 = arith.constant 0 : index
    %c0_21 = arith.constant 0 : index
    %46 = vector.load %arg2[%c0_20, %c0_21] : memref<24x6xf32, #tpu.memory_space<vmem>>, vector<8x1xf32>
    %c0_22 = arith.constant 0 : index
    %c1_23 = arith.constant 1 : index
    %47 = vector.load %arg2[%c0_22, %c1_23] : memref<24x6xf32, #tpu.memory_space<vmem>>, vector<8x1xf32>
    %48 = vector.broadcast %46 : vector<8x1xf32> to vector<8x128xf32>
    %49 = arith.mulf %48, %45 : vector<8x128xf32>
    %50 = vector.broadcast %47 : vector<8x1xf32> to vector<8x128xf32>
    %51 = arith.addf %49, %50 : vector<8x128xf32>
    %cst_24 = arith.constant 5.000000e-01 : f32
    %52 = vector.broadcast %cst_24 : f32 to vector<8x128xf32>
    %53 = arith.mulf %52, %51 : vector<8x128xf32>
    %cst_25 = arith.constant 0.707106769 : f32
    %54 = vector.broadcast %cst_25 : f32 to vector<8x128xf32>
    %55 = arith.mulf %51, %54 : vector<8x128xf32>
    %56 = math.erf %55 : vector<8x128xf32>
    %cst_26 = arith.constant 1.000000e+00 : f32
    %57 = vector.broadcast %cst_26 : f32 to vector<8x128xf32>
    %58 = arith.addf %57, %56 : vector<8x128xf32>
    %59 = arith.mulf %53, %58 : vector<8x128xf32>
    %c1_i32_27 = arith.constant 1 : i32
    %60 = tpu.dynamic_rotate %59 by %c1_i32_27 dim 1 : vector<8x128xf32>, i32 -> vector<8x128xf32>
    %cst_28 = arith.constant 0.000000e+00 : f32
    %61 = vector.shape_cast %26 : vector<1x128xi1> to vector<1x128xi1>
    %62 = vector.broadcast %61 : vector<1x128xi1> to vector<8x128xi1>
    %63 = vector.broadcast %cst_28 : f32 to vector<8x128xf32>
    %64 = arith.select %62, %60, %63 : vector<8x128xi1>, vector<8x128xf32>
    %c127_i32 = arith.constant 127 : i32
    %65 = tpu.dynamic_rotate %59 by %c127_i32 dim 1 : vector<8x128xf32>, i32 -> vector<8x128xf32>
    %cst_29 = arith.constant 0.000000e+00 : f32
    %66 = vector.shape_cast %44 : vector<1x128xi1> to vector<1x128xi1>
    %67 = vector.broadcast %66 : vector<1x128xi1> to vector<8x128xi1>
    %68 = vector.broadcast %cst_29 : f32 to vector<8x128xf32>
    %69 = arith.select %67, %65, %68 : vector<8x128xi1>, vector<8x128xf32>
    %c0_30 = arith.constant 0 : index
    %c0_31 = arith.constant 0 : index
    %70 = vector.load %arg3[%c0_30, %c0_31] : memref<72x24xf32, #tpu.memory_space<vmem>>, vector<8x8xf32>
    %c8 = arith.constant 8 : index
    %c0_32 = arith.constant 0 : index
    %71 = vector.load %arg3[%c8, %c0_32] : memref<72x24xf32, #tpu.memory_space<vmem>>, vector<8x8xf32>
    %c16_33 = arith.constant 16 : index
    %c0_34 = arith.constant 0 : index
    %72 = vector.load %arg3[%c16_33, %c0_34] : memref<72x24xf32, #tpu.memory_space<vmem>>, vector<8x8xf32>
    %c0_35 = arith.constant 0 : index
    %c0_36 = arith.constant 0 : index
    %73 = vector.load %arg4[%c0_35, %c0_36] : memref<24x1xf32, #tpu.memory_space<vmem>>, vector<8x1xf32>
    %cst_37 = arith.constant dense<0.000000e+00> : vector<8x128xf32>
    %74 = tpu.matmul %70, %64, %cst_37 {dimension_numbers = #tpu.dot_dimension_numbers<[1], [0], [0], [1], [0, 0, 1, 1], [], []>} : vector<8x8xf32>, vector<8x128xf32>, vector<8x128xf32> -> vector<8x128xf32>
    %cst_38 = arith.constant dense<0.000000e+00> : vector<8x128xf32>
    %75 = tpu.matmul %71, %59, %cst_38 {dimension_numbers = #tpu.dot_dimension_numbers<[1], [0], [0], [1], [0, 0, 1, 1], [], []>} : vector<8x8xf32>, vector<8x128xf32>, vector<8x128xf32> -> vector<8x128xf32>
    %76 = arith.addf %74, %75 : vector<8x128xf32>
    %cst_39 = arith.constant dense<0.000000e+00> : vector<8x128xf32>
    %77 = tpu.matmul %72, %69, %cst_39 {dimension_numbers = #tpu.dot_dimension_numbers<[1], [0], [0], [1], [0, 0, 1, 1], [], []>} : vector<8x8xf32>, vector<8x128xf32>, vector<8x128xf32> -> vector<8x128xf32>
    %78 = arith.addf %76, %77 : vector<8x128xf32>
    %79 = vector.broadcast %73 : vector<8x1xf32> to vector<8x128xf32>
    %80 = arith.addf %78, %79 : vector<8x128xf32>
    %c8_40 = arith.constant 8 : index
    %c0_41 = arith.constant 0 : index
    %81 = vector.load %arg6[%c8_40, %c0_41] : memref<32x128xf32, #tpu.memory_space<vmem>>, vector<8x128xf32>
    tpu.vector_store %arg6[%c8_40, %c0_41], %80 {strides = array<i32>} : memref<32x128xf32, #tpu.memory_space<vmem>>, vector<8x128xf32>,
    %c0_42 = arith.constant 0 : index
    %c0_43 = arith.constant 0 : index
    %82 = vector.load %arg6[%c0_42, %c0_43] : memref<32x128xf32, #tpu.memory_space<vmem>>, vector<16x128xf32>
    %c0_44 = arith.constant 0 : index
    %c2 = arith.constant 2 : index
    %83 = vector.load %arg2[%c0_44, %c2] : memref<24x6xf32, #tpu.memory_space<vmem>>, vector<16x1xf32>
    %c0_45 = arith.constant 0 : index
    %c3 = arith.constant 3 : index
    %84 = vector.load %arg2[%c0_45, %c3] : memref<24x6xf32, #tpu.memory_space<vmem>>, vector<16x1xf32>
    %85 = vector.broadcast %83 : vector<16x1xf32> to vector<16x128xf32>
    %86 = arith.mulf %85, %82 : vector<16x128xf32>
    %87 = vector.broadcast %84 : vector<16x1xf32> to vector<16x128xf32>
    %88 = arith.addf %86, %87 : vector<16x128xf32>
    %cst_46 = arith.constant 5.000000e-01 : f32
    %89 = vector.broadcast %cst_46 : f32 to vector<16x128xf32>
    %90 = arith.mulf %89, %88 : vector<16x128xf32>
    %cst_47 = arith.constant 0.707106769 : f32
    %91 = vector.broadcast %cst_47 : f32 to vector<16x128xf32>
    %92 = arith.mulf %88, %91 : vector<16x128xf32>
    %93 = math.erf %92 : vector<16x128xf32>
    %cst_48 = arith.constant 1.000000e+00 : f32
    %94 = vector.broadcast %cst_48 : f32 to vector<16x128xf32>
    %95 = arith.addf %94, %93 : vector<16x128xf32>
    %96 = arith.mulf %90, %95 : vector<16x128xf32>
    %c1_i32_49 = arith.constant 1 : i32
    %97 = tpu.dynamic_rotate %96 by %c1_i32_49 dim 1 : vector<16x128xf32>, i32 -> vector<16x128xf32>
    %cst_50 = arith.constant 0.000000e+00 : f32
    %98 = vector.shape_cast %26 : vector<1x128xi1> to vector<1x128xi1>
    %99 = vector.broadcast %98 : vector<1x128xi1> to vector<16x128xi1>
    %100 = vector.broadcast %cst_50 : f32 to vector<16x128xf32>
    %101 = arith.select %99, %97, %100 : vector<16x128xi1>, vector<16x128xf32>
    %c127_i32_51 = arith.constant 127 : i32
    %102 = tpu.dynamic_rotate %96 by %c127_i32_51 dim 1 : vector<16x128xf32>, i32 -> vector<16x128xf32>
    %cst_52 = arith.constant 0.000000e+00 : f32
    %103 = vector.shape_cast %44 : vector<1x128xi1> to vector<1x128xi1>
    %104 = vector.broadcast %103 : vector<1x128xi1> to vector<16x128xi1>
    %105 = vector.broadcast %cst_52 : f32 to vector<16x128xf32>
    %106 = arith.select %104, %102, %105 : vector<16x128xi1>, vector<16x128xf32>
    %c24 = arith.constant 24 : index
    %c0_53 = arith.constant 0 : index
    %107 = vector.load %arg3[%c24, %c0_53] : memref<72x24xf32, #tpu.memory_space<vmem>>, vector<8x16xf32>
    %c32 = arith.constant 32 : index
    %c0_54 = arith.constant 0 : index
    %108 = vector.load %arg3[%c32, %c0_54] : memref<72x24xf32, #tpu.memory_space<vmem>>, vector<8x16xf32>
    %c40 = arith.constant 40 : index
    %c0_55 = arith.constant 0 : index
    %109 = vector.load %arg3[%c40, %c0_55] : memref<72x24xf32, #tpu.memory_space<vmem>>, vector<8x16xf32>
    %c8_56 = arith.constant 8 : index
    %c0_57 = arith.constant 0 : index
    %110 = vector.load %arg4[%c8_56, %c0_57] : memref<24x1xf32, #tpu.memory_space<vmem>>, vector<8x1xf32>
    %cst_58 = arith.constant dense<0.000000e+00> : vector<8x128xf32>
    %111 = tpu.matmul %107, %101, %cst_58 {dimension_numbers = #tpu.dot_dimension_numbers<[1], [0], [0], [1], [0, 0, 1, 1], [], []>} : vector<8x16xf32>, vector<16x128xf32>, vector<8x128xf32> -> vector<8x128xf32>
    %cst_59 = arith.constant dense<0.000000e+00> : vector<8x128xf32>
    %112 = tpu.matmul %108, %96, %cst_59 {dimension_numbers = #tpu.dot_dimension_numbers<[1], [0], [0], [1], [0, 0, 1, 1], [], []>} : vector<8x16xf32>, vector<16x128xf32>, vector<8x128xf32> -> vector<8x128xf32>
    %113 = arith.addf %111, %112 : vector<8x128xf32>
    %cst_60 = arith.constant dense<0.000000e+00> : vector<8x128xf32>
    %114 = tpu.matmul %109, %106, %cst_60 {dimension_numbers = #tpu.dot_dimension_numbers<[1], [0], [0], [1], [0, 0, 1, 1], [], []>} : vector<8x16xf32>, vector<16x128xf32>, vector<8x128xf32> -> vector<8x128xf32>
    %115 = arith.addf %113, %114 : vector<8x128xf32>
    %116 = vector.broadcast %110 : vector<8x1xf32> to vector<8x128xf32>
    %117 = arith.addf %115, %116 : vector<8x128xf32>
    %c16_61 = arith.constant 16 : index
    %c0_62 = arith.constant 0 : index
    %118 = vector.load %arg6[%c16_61, %c0_62] : memref<32x128xf32, #tpu.memory_space<vmem>>, vector<8x128xf32>
    tpu.vector_store %arg6[%c16_61, %c0_62], %117 {strides = array<i32>} : memref<32x128xf32, #tpu.memory_space<vmem>>, vector<8x128xf32>,
    %c0_63 = arith.constant 0 : index
    %c0_64 = arith.constant 0 : index
    %119 = vector.load %arg6[%c0_63, %c0_64] : memref<32x128xf32, #tpu.memory_space<vmem>>, vector<24x128xf32>
    %c0_65 = arith.constant 0 : index
    %c4_66 = arith.constant 4 : index
    %120 = vector.load %arg2[%c0_65, %c4_66] : memref<24x6xf32, #tpu.memory_space<vmem>>, vector<24x1xf32>
    %c0_67 = arith.constant 0 : index
    %c5 = arith.constant 5 : index
    %121 = vector.load %arg2[%c0_67, %c5] : memref<24x6xf32, #tpu.memory_space<vmem>>, vector<24x1xf32>
    %122 = vector.broadcast %120 : vector<24x1xf32> to vector<24x128xf32>
    %123 = arith.mulf %122, %119 : vector<24x128xf32>
    %124 = vector.broadcast %121 : vector<24x1xf32> to vector<24x128xf32>
    %125 = arith.addf %123, %124 : vector<24x128xf32>
    %cst_68 = arith.constant 5.000000e-01 : f32
    %126 = vector.broadcast %cst_68 : f32 to vector<24x128xf32>
    %127 = arith.mulf %126, %125 : vector<24x128xf32>
    %cst_69 = arith.constant 0.707106769 : f32
    %128 = vector.broadcast %cst_69 : f32 to vector<24x128xf32>
    %129 = arith.mulf %125, %128 : vector<24x128xf32>
    %130 = math.erf %129 : vector<24x128xf32>
    %cst_70 = arith.constant 1.000000e+00 : f32
    %131 = vector.broadcast %cst_70 : f32 to vector<24x128xf32>
    %132 = arith.addf %131, %130 : vector<24x128xf32>
    %133 = arith.mulf %127, %132 : vector<24x128xf32>
    %c1_i32_71 = arith.constant 1 : i32
    %134 = tpu.dynamic_rotate %133 by %c1_i32_71 dim 1 : vector<24x128xf32>, i32 -> vector<24x128xf32>
    %cst_72 = arith.constant 0.000000e+00 : f32
    %135 = vector.shape_cast %26 : vector<1x128xi1> to vector<1x128xi1>
    %136 = vector.broadcast %135 : vector<1x128xi1> to vector<24x128xi1>
    %137 = vector.broadcast %cst_72 : f32 to vector<24x128xf32>
    %138 = arith.select %136, %134, %137 : vector<24x128xi1>, vector<24x128xf32>
    %c127_i32_73 = arith.constant 127 : i32
    %139 = tpu.dynamic_rotate %133 by %c127_i32_73 dim 1 : vector<24x128xf32>, i32 -> vector<24x128xf32>
    %cst_74 = arith.constant 0.000000e+00 : f32
    %140 = vector.shape_cast %44 : vector<1x128xi1> to vector<1x128xi1>
    %141 = vector.broadcast %140 : vector<1x128xi1> to vector<24x128xi1>
    %142 = vector.broadcast %cst_74 : f32 to vector<24x128xf32>
    %143 = arith.select %141, %139, %142 : vector<24x128xi1>, vector<24x128xf32>
    %c48 = arith.constant 48 : index
    %c0_75 = arith.constant 0 : index
    %144 = vector.load %arg3[%c48, %c0_75] : memref<72x24xf32, #tpu.memory_space<vmem>>, vector<8x24xf32>
    %c56 = arith.constant 56 : index
    %c0_76 = arith.constant 0 : index
    %145 = vector.load %arg3[%c56, %c0_76] : memref<72x24xf32, #tpu.memory_space<vmem>>, vector<8x24xf32>
    %c64 = arith.constant 64 : index
    %c0_77 = arith.constant 0 : index
    %146 = vector.load %arg3[%c64, %c0_77] : memref<72x24xf32, #tpu.memory_space<vmem>>, vector<8x24xf32>
    %c16_78 = arith.constant 16 : index
    %c0_79 = arith.constant 0 : index
    %147 = vector.load %arg4[%c16_78, %c0_79] : memref<24x1xf32, #tpu.memory_space<vmem>>, vector<8x1xf32>
    %cst_80 = arith.constant dense<0.000000e+00> : vector<8x128xf32>
    %148 = tpu.matmul %144, %138, %cst_80 {dimension_numbers = #tpu.dot_dimension_numbers<[1], [0], [0], [1], [0, 0, 1, 1], [], []>} : vector<8x24xf32>, vector<24x128xf32>, vector<8x128xf32> -> vector<8x128xf32>
    %cst_81 = arith.constant dense<0.000000e+00> : vector<8x128xf32>
    %149 = tpu.matmul %145, %133, %cst_81 {dimension_numbers = #tpu.dot_dimension_numbers<[1], [0], [0], [1], [0, 0, 1, 1], [], []>} : vector<8x24xf32>, vector<24x128xf32>, vector<8x128xf32> -> vector<8x128xf32>
    %150 = arith.addf %148, %149 : vector<8x128xf32>
    %cst_82 = arith.constant dense<0.000000e+00> : vector<8x128xf32>
    %151 = tpu.matmul %146, %143, %cst_82 {dimension_numbers = #tpu.dot_dimension_numbers<[1], [0], [0], [1], [0, 0, 1, 1], [], []>} : vector<8x24xf32>, vector<24x128xf32>, vector<8x128xf32> -> vector<8x128xf32>
    %152 = arith.addf %150, %151 : vector<8x128xf32>
    %153 = vector.broadcast %147 : vector<8x1xf32> to vector<8x128xf32>
    %154 = arith.addf %152, %153 : vector<8x128xf32>
    %c24_83 = arith.constant 24 : index
    %c0_84 = arith.constant 0 : index
    %155 = vector.load %arg6[%c24_83, %c0_84] : memref<32x128xf32, #tpu.memory_space<vmem>>, vector<8x128xf32>
    tpu.vector_store %arg6[%c24_83, %c0_84], %154 {strides = array<i32>} : memref<32x128xf32, #tpu.memory_space<vmem>>, vector<8x128xf32>,
    %c0_85 = arith.constant 0 : index
    %c0_86 = arith.constant 0 : index
    %156 = vector.load %arg6[%c0_85, %c0_86] : memref<32x128xf32, #tpu.memory_space<vmem>>, vector<4x16xf32>
    %c0_87 = arith.constant 0 : index
    %c0_88 = arith.constant 0 : index
    %c0_89 = arith.constant 0 : index
    %157 = vector.load %arg5[%c0_87, %c0_88, %c0_89] : memref<2x28x16xf32, #tpu.memory_space<vmem>>, vector<1x4x16xf32>
    %158 = vector.shape_cast %157 : vector<1x4x16xf32> to vector<4x16xf32>
    %159 = vector.shape_cast %156 : vector<4x16xf32> to vector<1x4x16xf32>
    tpu.vector_store %arg5[%c0_87, %c0_88, %c0_89], %159 {strides = array<i32>} : memref<2x28x16xf32, #tpu.memory_space<vmem>>, vector<1x4x16xf32>,
    %c8_90 = arith.constant 8 : index
    %c0_91 = arith.constant 0 : index
    %160 = vector.load %arg6[%c8_90, %c0_91] : memref<32x128xf32, #tpu.memory_space<vmem>>, vector<8x16xf32>
    %c0_92 = arith.constant 0 : index
    %c4_93 = arith.constant 4 : index
    %c0_94 = arith.constant 0 : index
    %161 = vector.load %arg5[%c0_92, %c4_93, %c0_94] : memref<2x28x16xf32, #tpu.memory_space<vmem>>, vector<1x8x16xf32>
    %162 = vector.shape_cast %161 : vector<1x8x16xf32> to vector<8x16xf32>
    %163 = vector.shape_cast %160 : vector<8x16xf32> to vector<1x8x16xf32>
    tpu.vector_store %arg5[%c0_92, %c4_93, %c0_94], %163 {strides = array<i32>} : memref<2x28x16xf32, #tpu.memory_space<vmem>>, vector<1x8x16xf32>,
    %c16_95 = arith.constant 16 : index
    %c0_96 = arith.constant 0 : index
    %164 = vector.load %arg6[%c16_95, %c0_96] : memref<32x128xf32, #tpu.memory_space<vmem>>, vector<8x16xf32>
    %c0_97 = arith.constant 0 : index
    %c12 = arith.constant 12 : index
    %c0_98 = arith.constant 0 : index
    %165 = vector.load %arg5[%c0_97, %c12, %c0_98] : memref<2x28x16xf32, #tpu.memory_space<vmem>>, vector<1x8x16xf32>
    %166 = vector.shape_cast %165 : vector<1x8x16xf32> to vector<8x16xf32>
    %167 = vector.shape_cast %164 : vector<8x16xf32> to vector<1x8x16xf32>
    tpu.vector_store %arg5[%c0_97, %c12, %c0_98], %167 {strides = array<i32>} : memref<2x28x16xf32, #tpu.memory_space<vmem>>, vector<1x8x16xf32>,
    %c24_99 = arith.constant 24 : index
    %c0_100 = arith.constant 0 : index
    %168 = vector.load %arg6[%c24_99, %c0_100] : memref<32x128xf32, #tpu.memory_space<vmem>>, vector<8x16xf32>
    %c0_101 = arith.constant 0 : index
    %c20 = arith.constant 20 : index
    %c0_102 = arith.constant 0 : index
    %169 = vector.load %arg5[%c0_101, %c20, %c0_102] : memref<2x28x16xf32, #tpu.memory_space<vmem>>, vector<1x8x16xf32>
    %170 = vector.shape_cast %169 : vector<1x8x16xf32> to vector<8x16xf32>
    %171 = vector.shape_cast %168 : vector<8x16xf32> to vector<1x8x16xf32>
    tpu.vector_store %arg5[%c0_101, %c20, %c0_102], %171 {strides = array<i32>} : memref<2x28x16xf32, #tpu.memory_space<vmem>>, vector<1x8x16xf32>,
    %c0_103 = arith.constant 0 : index
    %c16_104 = arith.constant 16 : index
    %172 = vector.load %arg6[%c0_103, %c16_104] : memref<32x128xf32, #tpu.memory_space<vmem>>, vector<4x16xf32>
    %c1_105 = arith.constant 1 : index
    %c0_106 = arith.constant 0 : index
    %c0_107 = arith.constant 0 : index
    %173 = vector.load %arg5[%c1_105, %c0_106, %c0_107] : memref<2x28x16xf32, #tpu.memory_space<vmem>>, vector<1x4x16xf32>
    %174 = vector.shape_cast %173 : vector<1x4x16xf32> to vector<4x16xf32>
    %175 = vector.shape_cast %172 : vector<4x16xf32> to vector<1x4x16xf32>
    tpu.vector_store %arg5[%c1_105, %c0_106, %c0_107], %175 {strides = array<i32>} : memref<2x28x16xf32, #tpu.memory_space<vmem>>, vector<1x4x16xf32>,
    %c8_108 = arith.constant 8 : index
    %c16_109 = arith.constant 16 : index
    %176 = vector.load %arg6[%c8_108, %c16_109] : memref<32x128xf32, #tpu.memory_space<vmem>>, vector<8x16xf32>
    %c1_110 = arith.constant 1 : index
    %c4_111 = arith.constant 4 : index
    %c0_112 = arith.constant 0 : index
    %177 = vector.load %arg5[%c1_110, %c4_111, %c0_112] : memref<2x28x16xf32, #tpu.memory_space<vmem>>, vector<1x8x16xf32>
    %178 = vector.shape_cast %177 : vector<1x8x16xf32> to vector<8x16xf32>
    %179 = vector.shape_cast %176 : vector<8x16xf32> to vector<1x8x16xf32>
    tpu.vector_store %arg5[%c1_110, %c4_111, %c0_112], %179 {strides = array<i32>} : memref<2x28x16xf32, #tpu.memory_space<vmem>>, vector<1x8x16xf32>,
    %c16_113 = arith.constant 16 : index
    %c16_114 = arith.constant 16 : index
    %180 = vector.load %arg6[%c16_113, %c16_114] : memref<32x128xf32, #tpu.memory_space<vmem>>, vector<8x16xf32>
    %c1_115 = arith.constant 1 : index
    %c12_116 = arith.constant 12 : index
    %c0_117 = arith.constant 0 : index
    %181 = vector.load %arg5[%c1_115, %c12_116, %c0_117] : memref<2x28x16xf32, #tpu.memory_space<vmem>>, vector<1x8x16xf32>
    %182 = vector.shape_cast %181 : vector<1x8x16xf32> to vector<8x16xf32>
    %183 = vector.shape_cast %180 : vector<8x16xf32> to vector<1x8x16xf32>
    tpu.vector_store %arg5[%c1_115, %c12_116, %c0_117], %183 {strides = array<i32>} : memref<2x28x16xf32, #tpu.memory_space<vmem>>, vector<1x8x16xf32>,
    %c24_118 = arith.constant 24 : index
    %c16_119 = arith.constant 16 : index
    %184 = vector.load %arg6[%c24_118, %c16_119] : memref<32x128xf32, #tpu.memory_space<vmem>>, vector<8x16xf32>
    %c1_120 = arith.constant 1 : index
    %c20_121 = arith.constant 20 : index
    %c0_122 = arith.constant 0 : index
    %185 = vector.load %arg5[%c1_120, %c20_121, %c0_122] : memref<2x28x16xf32, #tpu.memory_space<vmem>>, vector<1x8x16xf32>
    %186 = vector.shape_cast %185 : vector<1x8x16xf32> to vector<8x16xf32>
    %187 = vector.shape_cast %184 : vector<8x16xf32> to vector<1x8x16xf32>
    tpu.vector_store %arg5[%c1_120, %c20_121, %c0_122], %187 {strides = array<i32>} : memref<2x28x16xf32, #tpu.memory_space<vmem>>, vector<1x8x16xf32>,
    return
  }
  func.func @transform_0(%arg0: i32) -> (i32, i32, i32) {
    %c0_i32 = arith.constant 0 : i32
    %c0_i32_0 = arith.constant 0 : i32
    %c0_i32_1 = arith.constant 0 : i32
    return %arg0, %c0_i32, %c0_i32_0 : i32, i32, i32
  }
  func.func @transform_1(%arg0: i32) -> (i32, i32) {
    %c0_i32 = arith.constant 0 : i32
    %c0_i32_0 = arith.constant 0 : i32
    %c0_i32_1 = arith.constant 0 : i32
    return %c0_i32, %c0_i32_0 : i32, i32
  }
  func.func @transform_2(%arg0: i32) -> (i32, i32) {
    %c0_i32 = arith.constant 0 : i32
    %c0_i32_0 = arith.constant 0 : i32
    %c0_i32_1 = arith.constant 0 : i32
    return %c0_i32, %c0_i32_0 : i32, i32
  }
  func.func @transform_3(%arg0: i32) -> (i32, i32) {
    %c0_i32 = arith.constant 0 : i32
    %c0_i32_0 = arith.constant 0 : i32
    %c0_i32_1 = arith.constant 0 : i32
    return %c0_i32, %c0_i32_0 : i32, i32
  }
  func.func @transform_4(%arg0: i32) -> (i32, i32, i32) {
    %c0_i32 = arith.constant 0 : i32
    %c0_i32_0 = arith.constant 0 : i32
    %c0_i32_1 = arith.constant 0 : i32
    return %arg0, %c0_i32, %c0_i32_0 : i32, i32, i32
  }
}

</mosaic_0001>

<llo_original>
// kernel: tpu_custom_call.1
$region0: #{tpu_custom_call.1}
  #allocation0 [shape = 'u32[]', space=smem, size = 0x4, offset = 0x4, fixed_abs, tag = 'smem constant byte address 0x4 - core index']
  #allocation1 [shape = 'u32[72,128]{1,0:T(1,128)}', space=vmem, size = 0x9000, scoped, tag = 'internal scratch']
  #allocation2 [shape = 'f32[32,128]{1,0:T(8,128)}', space=vmem, size = 0x4000, scoped, tag = 'scratch operand']
  %s0 = inlined_call_operand.vmem [shape: f32[2,4,16], index: 0, kind: input, shape index: {}]
  %s1 = inlined_call_operand.vmem [shape: f32[24,6], index: 1, kind: input, shape index: {}]
  %s2 = inlined_call_operand.vmem [shape: f32[72,24], index: 2, kind: input, shape index: {}]
  %s3 = inlined_call_operand.vmem [shape: f32[24,1], index: 3, kind: input, shape index: {}]
  %s4 = inlined_call_operand.vmem [shape: f32[2,28,16], index: 4, kind: output, shape index: {}]
  %s5 = sld [smem:[#allocation0]]
  $region26: #{tpu_custom_call.1} parent=0
    _
  %s7 = ssub.s32 1, %s5
  %s8 = scalar_select 0, %s7, %s5
  // Predicated region
  $region2: #{tpu_custom_call.1} parent=0 // pred_check
    _
  $region3: #{tpu_custom_call.1} parent=0 // pred_check_branch
    %10 = sbr.rel (0) target = $region5
  $region4: #{tpu_custom_call.1} parent=0 // pred_region
    _
  $region5: #{tpu_custom_call.1} parent=0 // pred_fallthru
    _
  // Predicated region
  $region6: #{tpu_custom_call.1} parent=0 // pred_check
    _
  $region7: #{tpu_custom_call.1} parent=0 // pred_check_branch
    %12 = sbr.rel (0) target = $region9
  $region8: #{tpu_custom_call.1} parent=0 // pred_region
    _
  $region9: #{tpu_custom_call.1} parent=0 // pred_fallthru
    _
  // Predicated region
  $region10: #{tpu_custom_call.1} parent=0 // pred_check
    _
  $region11: #{tpu_custom_call.1} parent=0 // pred_check_branch
    %14 = sbr.rel (0) target = $region13
  $region12: #{tpu_custom_call.1} parent=0 // pred_region
    _
  $region13: #{tpu_custom_call.1} parent=0 // pred_fallthru
    _
  // Predicated region
  $region14: #{tpu_custom_call.1} parent=0 // pred_check
    _
  $region15: #{tpu_custom_call.1} parent=0 // pred_check_branch
    %16 = sbr.rel (0) target = $region17
  $region16: #{tpu_custom_call.1} parent=0 // pred_region
    _
  $region17: #{tpu_custom_call.1} parent=0 // pred_fallthru
    _
  %17 = vst [vmem:[#allocation2 + $0x4] sm:$0xf] 0.0
  %v18 = vld [vmem:[%s0] sm:$0xf]
  %vm19 = vcmask 125952
  %20 = vst.msk [vmem:[#allocation2] sm:$0xf] %vm19, %v18
  %s21 = scalar_lea.vmem %s0, 4
  %v22 = vld [vmem:[%s21] sm:$0xf]
  %24 = vrot.lane.b32.xlu0 %v22, 16
  %v25 = vpop.permute.xlu0 %24
  %vm27 = vcmask 257152
  %28 = vst.msk [vmem:[#allocation2] sm:$0xf] %vm27, %v25
  %v29 = vlaneseq
  %v30 = vand.u32 %v29, 127
  %vm31 = vcmp.lt.s32.totalorder %v30, 0
  %v32 = vsub.s32 0, %v30
  %v33 = vsel %vm31, %v32, %v30
  %v34 = vshrl.u32 %v33, 4
  %v35 = vand.u32 %v33, 15
  %v36 = vsub.s32 0, %v35
  %v37 = vsel %vm31, %v36, %v35
  %vm38 = vcmp.ne.s32.totalorder %v37, 0
  %vm39 = vcmp.lt.s32.totalorder %v37, 0
  %vm40 = vmand %vm39, %vm38
  %v41 = vadd.s32 %v37, 16
  %v42 = vsel %vm40, %v41, %v37
  %vm43 = vcmp.ne.s32.totalorder %v42, 0
  %vm44 = vcmp.ne.s32.totalorder %v42, 15
  %v45 = vld [vmem:[#allocation2] sm:$0xff]
  %v46 = vld [vmem:[%s1] sm:$0xff]
  %48 = vset.pattern.permute.xlu0 0
  %49 = vperm.xlu0 %48, %v46
  %v50 = vpop.permute.xlu0 %49
  %v52 = vmul.f32 %v50, %v45
  %53 = vset.pattern.permute.xlu0 1
  %54 = vperm.xlu0 %53, %v46
  %v55 = vpop.permute.xlu0 %54
  %v57 = vadd.f32 %v52, %v55
  %v58 = vmul.f32 %v57, 0.5
  %v59 = vmul.f32 %v57, 0.70710677
  %v60 = vmul.f32 %v59, %v59
  %v61 = vmin.f32 16.0, %v60
  %v62 = vmul.f32 %v61, 2.1237322e-06
  %v63 = vadd.f32 %v62, 0.00028619796
  %v64 = vmul.f32 %v61, %v63
  %v65 = vadd.f32 %v64, 0.0036580483
  %v66 = vmul.f32 %v61, %v65
  %v67 = vadd.f32 %v66, 0.05243302
  %v68 = vmul.f32 %v61, %v67
  %v69 = vadd.f32 %v68, 0.18741608
  %v70 = vmul.f32 %v61, %v69
  %v71 = vadd.f32 %v70, 1.1283791
  %v72 = vmul.f32 %v59, %v71
  %v73 = vmul.f32 %v61, 3.8918573e-05
  %v74 = vadd.f32 %v73, 0.001143296
  %v75 = vmul.f32 %v61, %v74
  %v76 = vadd.f32 %v75, 0.014752088
  %v77 = vmul.f32 %v61, %v76
  %v78 = vadd.f32 %v77, 0.112945676
  %v79 = vmul.f32 %v61, %v78
  %v80 = vadd.f32 %v79, 0.4994258
  %v81 = vmul.f32 %v61, %v80
  %v82 = vadd.f32 %v81, 1.0
  %v83 = vrcp.pop %v82
  %v84 = vmul.f32 %v82, %v83
  %v85 = vsub.f32 1.0, %v84
  %v86 = vmul.f32 %v83, %v85
  %v87 = vadd.f32 %v83, %v86
  %vm88 = vweird.f32 %v82
  %vm89 = vweird.f32 %v83
  %vm90 = vmor %vm88, %vm89
  %v91 = vsel %vm90, %v83, %v87
  %v92 = vand.u32 2147483647, %v82
  %vm93 = vcmp.eq.f32.partialorder %v92, 8.507059e+37
  %v94 = vand.u32 %v82, 2147483648
  %v95 = vor.u32 1.1754944e-38, %v94
  %v96 = vsel %vm93, %v95, %v91
  %v97 = vmul.f32 %v72, %v96
  %v98 = vmin.f32 %v97, 1.0
  %v99 = vmax.f32 %v98, -1.0
  %v100 = vadd.f32 %v99, 1.0
  %v101 = vmul.f32 %v58, %v100
  %102 = vrot.lane.b32.xlu0 %v101, 1
  %v103 = vpop.permute.xlu0 %102
  %v104 = vsel %vm43, 1, 0
  %vm105 = vcmp.eq.s32.totalorder %v104, 1
  %v106 = vsel %vm105, %v103, 0.0
  %107 = vrot.lane.b32.xlu0 %v101, 127
  %v108 = vpop.permute.xlu0 %107
  %v109 = vsel %vm44, 1, 0
  %vm110 = vcmp.eq.s32.totalorder %v109, 1
  %v111 = vsel %vm110, %v108, 0.0
  %v112 = vld [vmem:[%s2] sm:$0xff]
  %v113 = vld [vmem:[%s2 + $0x8] sm:$0xff]
  %v114 = vld [vmem:[%s2 + $0x10] sm:$0xff]
  %v115 = vld [vmem:[%s3] sm:$0xff]
  %vm116 = vcmask 64512
  %v118 = vsel %vm116, %v113, 0
  %120 = vmatpush.msra.mxu0 0.0
  %121 = vmatpush.msra.mxu0 0.0
  %122 = vmatpush.msra.mxu0 0.0
  %123 = vmatpush.msra.mxu0 0.0
  %124 = vmatpush.msra.mxu0 0.0
  %125 = vmatpush.msra.mxu0 0.0
  %126 = vmatpush.msra.mxu0 0.0
  %127 = vmatpush.msra.mxu0 0.0
  %128 = vmatpush.msra.mxu0 0.0
  %129 = vmatpush.msra.mxu0 0.0
  %130 = vmatpush.msra.mxu0 0.0
  %131 = vmatpush.msra.mxu0 0.0
  %132 = vmatpush.msra.mxu0 0.0
  %133 = vmatpush.msra.mxu0 0.0
  %134 = vmatpush.msra.mxu0 0.0
  %135 = vmatpush.msra.mxu0 %v101
  %136 = vmatmul.f32.gmra.mxu0 %v118
  %v137 = vpop.f32.mrf.mxu0
  %v138 = vadd.f32 0.0, %v137
  %139 = vdwg.mxu0
  %v141 = vsel %vm116, %v112, 0
  %143 = vmatpush.msra.mxu0 0.0
  %144 = vmatpush.msra.mxu0 0.0
  %145 = vmatpush.msra.mxu0 0.0
  %146 = vmatpush.msra.mxu0 0.0
  %147 = vmatpush.msra.mxu0 0.0
  %148 = vmatpush.msra.mxu0 0.0
  %149 = vmatpush.msra.mxu0 0.0
  %150 = vmatpush.msra.mxu0 0.0
  %151 = vmatpush.msra.mxu0 0.0
  %152 = vmatpush.msra.mxu0 0.0
  %153 = vmatpush.msra.mxu0 0.0
  %154 = vmatpush.msra.mxu0 0.0
  %155 = vmatpush.msra.mxu0 0.0
  %156 = vmatpush.msra.mxu0 0.0
  %157 = vmatpush.msra.mxu0 0.0
  %158 = vmatpush.msra.mxu0 %v106
  %159 = vmatmul.f32.gmra.mxu0 %v141
  %v160 = vpop.f32.mrf.mxu0
  %v161 = vadd.f32 %v138, %v160
  %162 = vdwg.mxu0
  %v164 = vsel %vm116, %v114, 0
  %166 = vmatpush.msra.mxu0 0.0
  %167 = vmatpush.msra.mxu0 0.0
  %168 = vmatpush.msra.mxu0 0.0
  %169 = vmatpush.msra.mxu0 0.0
  %170 = vmatpush.msra.mxu0 0.0
  %171 = vmatpush.msra.mxu0 0.0
  %172 = vmatpush.msra.mxu0 0.0
  %173 = vmatpush.msra.mxu0 0.0
  %174 = vmatpush.msra.mxu0 0.0
  %175 = vmatpush.msra.mxu0 0.0
  %176 = vmatpush.msra.mxu0 0.0
  %177 = vmatpush.msra.mxu0 0.0
  %178 = vmatpush.msra.mxu0 0.0
  %179 = vmatpush.msra.mxu0 0.0
  %180 = vmatpush.msra.mxu0 0.0
  %181 = vmatpush.msra.mxu0 %v111
  %182 = vmatmul.f32.gmra.mxu0 %v164
  %v183 = vpop.f32.mrf.mxu0
  %v184 = vadd.f32 0.0, %v183
  %185 = vdwg.mxu0
  %v186 = vadd.f32 %v161, %v184
  %188 = vset.pattern.permute.xlu0 0
  %189 = vperm.xlu0 %188, %v115
  %v190 = vpop.permute.xlu0 %189
  %v192 = vadd.f32 %v186, %v190
  %193 = vst [vmem:[#allocation2 + $0x8] sm:$0xff] %v192
  %v194 = vld [vmem:[#allocation2] sm:$0xff]
  %v195 = vld [vmem:[#allocation2 + $0x8] sm:$0xff]
  %v196 = vld [vmem:[%s1] sm:$0xff]
  %v197 = vld [vmem:[%s1 + $0x8] sm:$0xff]
  %199 = vset.pattern.permute.xlu0 2
  %200 = vperm.xlu0 %199, %v196
  %v201 = vpop.permute.xlu0 %200
  %204 = vset.pattern.permute.xlu0 2
  %205 = vperm.xlu0 %204, %v197
  %v206 = vpop.permute.xlu0 %205
  %v208 = vmul.f32 %v201, %v194
  %v209 = vmul.f32 %v206, %v195
  %210 = vset.pattern.permute.xlu0 3
  %211 = vperm.xlu0 %210, %v196
  %v212 = vpop.permute.xlu0 %211
  %214 = vset.pattern.permute.xlu0 3
  %215 = vperm.xlu0 %214, %v197
  %v216 = vpop.permute.xlu0 %215
  %v218 = vadd.f32 %v208, %v212
  %v219 = vadd.f32 %v209, %v216
  %v220 = vmul.f32 %v218, 0.5
  %v221 = vmul.f32 %v219, 0.5
  %v222 = vmul.f32 %v218, 0.70710677
  %v223 = vmul.f32 %v219, 0.70710677
  %v224 = vmul.f32 %v222, %v222
  %v225 = vmin.f32 16.0, %v224
  %v226 = vmul.f32 %v225, 2.1237322e-06
  %v227 = vadd.f32 %v226, 0.00028619796
  %v228 = vmul.f32 %v225, %v227
  %v229 = vadd.f32 %v228, 0.0036580483
  %v230 = vmul.f32 %v225, %v229
  %v231 = vadd.f32 %v230, 0.05243302
  %v232 = vmul.f32 %v225, %v231
  %v233 = vadd.f32 %v232, 0.18741608
  %v234 = vmul.f32 %v225, %v233
  %v235 = vadd.f32 %v234, 1.1283791
  %v236 = vmul.f32 %v222, %v235
  %v237 = vmul.f32 %v225, 3.8918573e-05
  %v238 = vadd.f32 %v237, 0.001143296
  %v239 = vmul.f32 %v225, %v238
  %v240 = vadd.f32 %v239, 0.014752088
  %v241 = vmul.f32 %v225, %v240
  %v242 = vadd.f32 %v241, 0.112945676
  %v243 = vmul.f32 %v225, %v242
  %v244 = vadd.f32 %v243, 0.4994258
  %v245 = vmul.f32 %v225, %v244
  %v246 = vadd.f32 %v245, 1.0
  %v247 = vrcp.pop %v246
  %v248 = vmul.f32 %v246, %v247
  %v249 = vsub.f32 1.0, %v248
  %v250 = vmul.f32 %v247, %v249
  %v251 = vadd.f32 %v247, %v250
  %vm252 = vweird.f32 %v246
  %vm253 = vweird.f32 %v247
  %vm254 = vmor %vm252, %vm253
  %v255 = vsel %vm254, %v247, %v251
  %v256 = vand.u32 2147483647, %v246
  %vm257 = vcmp.eq.f32.partialorder %v256, 8.507059e+37
  %v258 = vand.u32 %v246, 2147483648
  %v259 = vor.u32 1.1754944e-38, %v258
  %v260 = vsel %vm257, %v259, %v255
  %v261 = vmul.f32 %v236, %v260
  %v262 = vmin.f32 %v261, 1.0
  %v263 = vmax.f32 %v262, -1.0
  %v264 = vmul.f32 %v223, %v223
  %v265 = vmin.f32 16.0, %v264
  %v266 = vmul.f32 %v265, 2.1237322e-06
  %v267 = vadd.f32 %v266, 0.00028619796
  %v268 = vmul.f32 %v265, %v267
  %v269 = vadd.f32 %v268, 0.0036580483
  %v270 = vmul.f32 %v265, %v269
  %v271 = vadd.f32 %v270, 0.05243302
  %v272 = vmul.f32 %v265, %v271
  %v273 = vadd.f32 %v272, 0.18741608
  %v274 = vmul.f32 %v265, %v273
  %v275 = vadd.f32 %v274, 1.1283791
  %v276 = vmul.f32 %v223, %v275
  %v277 = vmul.f32 %v265, 3.8918573e-05
  %v278 = vadd.f32 %v277, 0.001143296
  %v279 = vmul.f32 %v265, %v278
  %v280 = vadd.f32 %v279, 0.014752088
  %v281 = vmul.f32 %v265, %v280
  %v282 = vadd.f32 %v281, 0.112945676
  %v283 = vmul.f32 %v265, %v282
  %v284 = vadd.f32 %v283, 0.4994258
  %v285 = vmul.f32 %v265, %v284
  %v286 = vadd.f32 %v285, 1.0
  %v287 = vrcp.pop %v286
  %v288 = vmul.f32 %v286, %v287
  %v289 = vsub.f32 1.0, %v288
  %v290 = vmul.f32 %v287, %v289
  %v291 = vadd.f32 %v287, %v290
  %vm292 = vweird.f32 %v286
  %vm293 = vweird.f32 %v287
  %vm294 = vmor %vm292, %vm293
  %v295 = vsel %vm294, %v287, %v291
  %v296 = vand.u32 2147483647, %v286
  %vm297 = vcmp.eq.f32.partialorder %v296, 8.507059e+37
  %v298 = vand.u32 %v286, 2147483648
  %v299 = vor.u32 1.1754944e-38, %v298
  %v300 = vsel %vm297, %v299, %v295
  %v301 = vmul.f32 %v276, %v300
  %v302 = vmin.f32 %v301, 1.0
  %v303 = vmax.f32 %v302, -1.0
  %v304 = vadd.f32 %v263, 1.0
  %v305 = vadd.f32 %v303, 1.0
  %v306 = vmul.f32 %v220, %v304
  %v307 = vmul.f32 %v221, %v305
  %308 = vrot.lane.b32.xlu0 %v306, 1
  %v309 = vpop.permute.xlu0 %308
  %310 = vrot.lane.b32.xlu0 %v307, 1
  %v311 = vpop.permute.xlu0 %310
  %v312 = vsel %vm105, %v309, 0.0
  %v313 = vsel %vm105, %v311, 0.0
  %314 = vrot.lane.b32.xlu0 %v306, 127
  %v315 = vpop.permute.xlu0 %314
  %316 = vrot.lane.b32.xlu0 %v307, 127
  %v317 = vpop.permute.xlu0 %316
  %v318 = vsel %vm110, %v315, 0.0
  %v319 = vsel %vm110, %v317, 0.0
  %v320 = vld [vmem:[%s2 + $0x18] sm:$0xff]
  %v321 = vld [vmem:[%s2 + $0x20] sm:$0xff]
  %v322 = vld [vmem:[%s2 + $0x28] sm:$0xff]
  %v323 = vld [vmem:[%s3 + $0x8] sm:$0xff]
  %vm324 = vcmask 130048
  %v326 = vsel %vm324, %v321, 0
  %328 = vmatpush.msra.mxu0 0.0
  %329 = vmatpush.msra.mxu0 0.0
  %330 = vmatpush.msra.mxu0 0.0
  %331 = vmatpush.msra.mxu0 0.0
  %332 = vmatpush.msra.mxu0 0.0
  %333 = vmatpush.msra.mxu0 0.0
  %334 = vmatpush.msra.mxu0 0.0
  %335 = vmatpush.msra.mxu0 0.0
  %336 = vmatpush.msra.mxu0 0.0
  %337 = vmatpush.msra.mxu0 0.0
  %338 = vmatpush.msra.mxu0 0.0
  %339 = vmatpush.msra.mxu0 0.0
  %340 = vmatpush.msra.mxu0 0.0
  %341 = vmatpush.msra.mxu0 0.0
  %342 = vmatpush.msra.mxu0 %v307
  %343 = vmatpush.msra.mxu0 %v306
  %344 = vmatmul.f32.gmra.mxu0 %v326
  %v345 = vpop.f32.mrf.mxu0
  %v346 = vadd.f32 0.0, %v345
  %347 = vdwg.mxu0
  %v349 = vsel %vm324, %v320, 0
  %351 = vmatpush.msra.mxu0 0.0
  %352 = vmatpush.msra.mxu0 0.0
  %353 = vmatpush.msra.mxu0 0.0
  %354 = vmatpush.msra.mxu0 0.0
  %355 = vmatpush.msra.mxu0 0.0
  %356 = vmatpush.msra.mxu0 0.0
  %357 = vmatpush.msra.mxu0 0.0
  %358 = vmatpush.msra.mxu0 0.0
  %359 = vmatpush.msra.mxu0 0.0
  %360 = vmatpush.msra.mxu0 0.0
  %361 = vmatpush.msra.mxu0 0.0
  %362 = vmatpush.msra.mxu0 0.0
  %363 = vmatpush.msra.mxu0 0.0
  %364 = vmatpush.msra.mxu0 0.0
  %365 = vmatpush.msra.mxu0 %v313
  %366 = vmatpush.msra.mxu0 %v312
  %367 = vmatmul.f32.gmra.mxu0 %v349
  %v368 = vpop.f32.mrf.mxu0
  %v369 = vadd.f32 %v346, %v368
  %370 = vdwg.mxu0
  %v372 = vsel %vm324, %v322, 0
  %374 = vmatpush.msra.mxu0 0.0
  %375 = vmatpush.msra.mxu0 0.0
  %376 = vmatpush.msra.mxu0 0.0
  %377 = vmatpush.msra.mxu0 0.0
  %378 = vmatpush.msra.mxu0 0.0
  %379 = vmatpush.msra.mxu0 0.0
  %380 = vmatpush.msra.mxu0 0.0
  %381 = vmatpush.msra.mxu0 0.0
  %382 = vmatpush.msra.mxu0 0.0
  %383 = vmatpush.msra.mxu0 0.0
  %384 = vmatpush.msra.mxu0 0.0
  %385 = vmatpush.msra.mxu0 0.0
  %386 = vmatpush.msra.mxu0 0.0
  %387 = vmatpush.msra.mxu0 0.0
  %388 = vmatpush.msra.mxu0 %v319
  %389 = vmatpush.msra.mxu0 %v318
  %390 = vmatmul.f32.gmra.mxu0 %v372
  %v391 = vpop.f32.mrf.mxu0
  %v392 = vadd.f32 0.0, %v391
  %393 = vdwg.mxu0
  %v394 = vadd.f32 %v369, %v392
  %396 = vset.pattern.permute.xlu0 0
  %397 = vperm.xlu0 %396, %v323
  %v398 = vpop.permute.xlu0 %397
  %v400 = vadd.f32 %v394, %v398
  %401 = vst [vmem:[#allocation2 + $0x10] sm:$0xff] %v400
  %v402 = vld [vmem:[#allocation2] sm:$0xff]
  %v403 = vld [vmem:[#allocation2 + $0x8] sm:$0xff]
  %v404 = vld [vmem:[#allocation2 + $0x10] sm:$0xff]
  %v405 = vld [vmem:[%s1] sm:$0xff]
  %v406 = vld [vmem:[%s1 + $0x8] sm:$0xff]
  %v407 = vld [vmem:[%s1 + $0x10] sm:$0xff]
  %409 = vset.pattern.permute.xlu0 4
  %410 = vperm.xlu0 %409, %v405
  %v411 = vpop.permute.xlu0 %410
  %414 = vset.pattern.permute.xlu0 4
  %415 = vperm.xlu0 %414, %v406
  %v416 = vpop.permute.xlu0 %415
  %419 = vset.pattern.permute.xlu0 4
  %420 = vperm.xlu0 %419, %v407
  %v421 = vpop.permute.xlu0 %420
  %v423 = vmul.f32 %v411, %v402
  %v424 = vmul.f32 %v416, %v403
  %v425 = vmul.f32 %v421, %v404
  %426 = vset.pattern.permute.xlu0 5
  %427 = vperm.xlu0 %426, %v405
  %v428 = vpop.permute.xlu0 %427
  %430 = vset.pattern.permute.xlu0 5
  %431 = vperm.xlu0 %430, %v406
  %v432 = vpop.permute.xlu0 %431
  %434 = vset.pattern.permute.xlu0 5
  %435 = vperm.xlu0 %434, %v407
  %v436 = vpop.permute.xlu0 %435
  %v438 = vadd.f32 %v423, %v428
  %v439 = vadd.f32 %v424, %v432
  %v440 = vadd.f32 %v425, %v436
  %v441 = vmul.f32 %v438, 0.5
  %v442 = vmul.f32 %v439, 0.5
  %v443 = vmul.f32 %v440, 0.5
  %v444 = vmul.f32 %v438, 0.70710677
  %v445 = vmul.f32 %v439, 0.70710677
  %v446 = vmul.f32 %v440, 0.70710677
  %v447 = vmul.f32 %v444, %v444
  %v448 = vmin.f32 16.0, %v447
  %v449 = vmul.f32 %v448, 2.1237322e-06
  %v450 = vadd.f32 %v449, 0.00028619796
  %v451 = vmul.f32 %v448, %v450
  %v452 = vadd.f32 %v451, 0.0036580483
  %v453 = vmul.f32 %v448, %v452
  %v454 = vadd.f32 %v453, 0.05243302
  %v455 = vmul.f32 %v448, %v454
  %v456 = vadd.f32 %v455, 0.18741608
  %v457 = vmul.f32 %v448, %v456
  %v458 = vadd.f32 %v457, 1.1283791
  %v459 = vmul.f32 %v444, %v458
  %v460 = vmul.f32 %v448, 3.8918573e-05
  %v461 = vadd.f32 %v460, 0.001143296
  %v462 = vmul.f32 %v448, %v461
  %v463 = vadd.f32 %v462, 0.014752088
  %v464 = vmul.f32 %v448, %v463
  %v465 = vadd.f32 %v464, 0.112945676
  %v466 = vmul.f32 %v448, %v465
  %v467 = vadd.f32 %v466, 0.4994258
  %v468 = vmul.f32 %v448, %v467
  %v469 = vadd.f32 %v468, 1.0
  %v470 = vrcp.pop %v469
  %v471 = vmul.f32 %v469, %v470
  %v472 = vsub.f32 1.0, %v471
  %v473 = vmul.f32 %v470, %v472
  %v474 = vadd.f32 %v470, %v473
  %vm475 = vweird.f32 %v469
  %vm476 = vweird.f32 %v470
  %vm477 = vmor %vm475, %vm476
  %v478 = vsel %vm477, %v470, %v474
  %v479 = vand.u32 2147483647, %v469
  %vm480 = vcmp.eq.f32.partialorder %v479, 8.507059e+37
  %v481 = vand.u32 %v469, 2147483648
  %v482 = vor.u32 1.1754944e-38, %v481
  %v483 = vsel %vm480, %v482, %v478
  %v484 = vmul.f32 %v459, %v483
  %v485 = vmin.f32 %v484, 1.0
  %v486 = vmax.f32 %v485, -1.0
  %v487 = vmul.f32 %v445, %v445
  %v488 = vmin.f32 16.0, %v487
  %v489 = vmul.f32 %v488, 2.1237322e-06
  %v490 = vadd.f32 %v489, 0.00028619796
  %v491 = vmul.f32 %v488, %v490
  %v492 = vadd.f32 %v491, 0.0036580483
  %v493 = vmul.f32 %v488, %v492
  %v494 = vadd.f32 %v493, 0.05243302
  %v495 = vmul.f32 %v488, %v494
  %v496 = vadd.f32 %v495, 0.18741608
  %v497 = vmul.f32 %v488, %v496
  %v498 = vadd.f32 %v497, 1.1283791
  %v499 = vmul.f32 %v445, %v498
  %v500 = vmul.f32 %v488, 3.8918573e-05
  %v501 = vadd.f32 %v500, 0.001143296
  %v502 = vmul.f32 %v488, %v501
  %v503 = vadd.f32 %v502, 0.014752088
  %v504 = vmul.f32 %v488, %v503
  %v505 = vadd.f32 %v504, 0.112945676
  %v506 = vmul.f32 %v488, %v505
  %v507 = vadd.f32 %v506, 0.4994258
  %v508 = vmul.f32 %v488, %v507
  %v509 = vadd.f32 %v508, 1.0
  %v510 = vrcp.pop %v509
  %v511 = vmul.f32 %v509, %v510
  %v512 = vsub.f32 1.0, %v511
  %v513 = vmul.f32 %v510, %v512
  %v514 = vadd.f32 %v510, %v513
  %vm515 = vweird.f32 %v509
  %vm516 = vweird.f32 %v510
  %vm517 = vmor %vm515, %vm516
  %v518 = vsel %vm517, %v510, %v514
  %v519 = vand.u32 2147483647, %v509
  %vm520 = vcmp.eq.f32.partialorder %v519, 8.507059e+37
  %v521 = vand.u32 %v509, 2147483648
  %v522 = vor.u32 1.1754944e-38, %v521
  %v523 = vsel %vm520, %v522, %v518
  %v524 = vmul.f32 %v499, %v523
  %v525 = vmin.f32 %v524, 1.0
  %v526 = vmax.f32 %v525, -1.0
  %v527 = vmul.f32 %v446, %v446
  %v528 = vmin.f32 16.0, %v527
  %v529 = vmul.f32 %v528, 2.1237322e-06
  %v530 = vadd.f32 %v529, 0.00028619796
  %v531 = vmul.f32 %v528, %v530
  %v532 = vadd.f32 %v531, 0.0036580483
  %v533 = vmul.f32 %v528, %v532
  %v534 = vadd.f32 %v533, 0.05243302
  %v535 = vmul.f32 %v528, %v534
  %v536 = vadd.f32 %v535, 0.18741608
  %v537 = vmul.f32 %v528, %v536
  %v538 = vadd.f32 %v537, 1.1283791
  %v539 = vmul.f32 %v446, %v538
  %v540 = vmul.f32 %v528, 3.8918573e-05
  %v541 = vadd.f32 %v540, 0.001143296
  %v542 = vmul.f32 %v528, %v541
  %v543 = vadd.f32 %v542, 0.014752088
  %v544 = vmul.f32 %v528, %v543
  %v545 = vadd.f32 %v544, 0.112945676
  %v546 = vmul.f32 %v528, %v545
  %v547 = vadd.f32 %v546, 0.4994258
  %v548 = vmul.f32 %v528, %v547
  %v549 = vadd.f32 %v548, 1.0
  %v550 = vrcp.pop %v549
  %v551 = vmul.f32 %v549, %v550
  %v552 = vsub.f32 1.0, %v551
  %v553 = vmul.f32 %v550, %v552
  %v554 = vadd.f32 %v550, %v553
  %vm555 = vweird.f32 %v549
  %vm556 = vweird.f32 %v550
  %vm557 = vmor %vm555, %vm556
  %v558 = vsel %vm557, %v550, %v554
  %v559 = vand.u32 2147483647, %v549
  %vm560 = vcmp.eq.f32.partialorder %v559, 8.507059e+37
  %v561 = vand.u32 %v549, 2147483648
  %v562 = vor.u32 1.1754944e-38, %v561
  %v563 = vsel %vm560, %v562, %v558
  %v564 = vmul.f32 %v539, %v563
  %v565 = vmin.f32 %v564, 1.0
  %v566 = vmax.f32 %v565, -1.0
  %v567 = vadd.f32 %v486, 1.0
  %v568 = vadd.f32 %v526, 1.0
  %v569 = vadd.f32 %v566, 1.0
  %v570 = vmul.f32 %v441, %v567
  %v571 = vmul.f32 %v442, %v568
  %v572 = vmul.f32 %v443, %v569
  %573 = vrot.lane.b32.xlu0 %v570, 1
  %v574 = vpop.permute.xlu0 %573
  %575 = vrot.lane.b32.xlu0 %v571, 1
  %v576 = vpop.permute.xlu0 %575
  %577 = vrot.lane.b32.xlu0 %v572, 1
  %v578 = vpop.permute.xlu0 %577
  %v579 = vsel %vm105, %v574, 0.0
  %v580 = vsel %vm105, %v576, 0.0
  %v581 = vsel %vm105, %v578, 0.0
  %582 = vrot.lane.b32.xlu0 %v570, 127
  %v583 = vpop.permute.xlu0 %582
  %584 = vrot.lane.b32.xlu0 %v571, 127
  %v585 = vpop.permute.xlu0 %584
  %586 = vrot.lane.b32.xlu0 %v572, 127
  %v587 = vpop.permute.xlu0 %586
  %v588 = vsel %vm110, %v583, 0.0
  %v589 = vsel %vm110, %v585, 0.0
  %v590 = vsel %vm110, %v587, 0.0
  %v591 = vld [vmem:[%s2 + $0x30] sm:$0xff]
  %v592 = vld [vmem:[%s2 + $0x38] sm:$0xff]
  %v593 = vld [vmem:[%s2 + $0x40] sm:$0xff]
  %v594 = vld [vmem:[%s3 + $0x10] sm:$0xff]
  %vm595 = vcmask 195584
  %v597 = vsel %vm595, %v592, 0
  %599 = vmatpush.msra.mxu0 0.0
  %600 = vmatpush.msra.mxu0 0.0
  %601 = vmatpush.msra.mxu0 0.0
  %602 = vmatpush.msra.mxu0 0.0
  %603 = vmatpush.msra.mxu0 0.0
  %604 = vmatpush.msra.mxu0 0.0
  %605 = vmatpush.msra.mxu0 0.0
  %606 = vmatpush.msra.mxu0 0.0
  %607 = vmatpush.msra.mxu0 0.0
  %608 = vmatpush.msra.mxu0 0.0
  %609 = vmatpush.msra.mxu0 0.0
  %610 = vmatpush.msra.mxu0 0.0
  %611 = vmatpush.msra.mxu0 0.0
  %612 = vmatpush.msra.mxu0 %v572
  %613 = vmatpush.msra.mxu0 %v571
  %614 = vmatpush.msra.mxu0 %v570
  %615 = vmatmul.f32.gmra.mxu0 %v597
  %v616 = vpop.f32.mrf.mxu0
  %v617 = vadd.f32 0.0, %v616
  %618 = vdwg.mxu0
  %v620 = vsel %vm595, %v591, 0
  %622 = vmatpush.msra.mxu0 0.0
  %623 = vmatpush.msra.mxu0 0.0
  %624 = vmatpush.msra.mxu0 0.0
  %625 = vmatpush.msra.mxu0 0.0
  %626 = vmatpush.msra.mxu0 0.0
  %627 = vmatpush.msra.mxu0 0.0
  %628 = vmatpush.msra.mxu0 0.0
  %629 = vmatpush.msra.mxu0 0.0
  %630 = vmatpush.msra.mxu0 0.0
  %631 = vmatpush.msra.mxu0 0.0
  %632 = vmatpush.msra.mxu0 0.0
  %633 = vmatpush.msra.mxu0 0.0
  %634 = vmatpush.msra.mxu0 0.0
  %635 = vmatpush.msra.mxu0 %v581
  %636 = vmatpush.msra.mxu0 %v580
  %637 = vmatpush.msra.mxu0 %v579
  %638 = vmatmul.f32.gmra.mxu0 %v620
  %v639 = vpop.f32.mrf.mxu0
  %v640 = vadd.f32 %v617, %v639
  %641 = vdwg.mxu0
  %v643 = vsel %vm595, %v593, 0
  %645 = vmatpush.msra.mxu0 0.0
  %646 = vmatpush.msra.mxu0 0.0
  %647 = vmatpush.msra.mxu0 0.0
  %648 = vmatpush.msra.mxu0 0.0
  %649 = vmatpush.msra.mxu0 0.0
  %650 = vmatpush.msra.mxu0 0.0
  %651 = vmatpush.msra.mxu0 0.0
  %652 = vmatpush.msra.mxu0 0.0
  %653 = vmatpush.msra.mxu0 0.0
  %654 = vmatpush.msra.mxu0 0.0
  %655 = vmatpush.msra.mxu0 0.0
  %656 = vmatpush.msra.mxu0 0.0
  %657 = vmatpush.msra.mxu0 0.0
  %658 = vmatpush.msra.mxu0 %v590
  %659 = vmatpush.msra.mxu0 %v589
  %660 = vmatpush.msra.mxu0 %v588
  %661 = vmatmul.f32.gmra.mxu0 %v643
  %v662 = vpop.f32.mrf.mxu0
  %v663 = vadd.f32 0.0, %v662
  %664 = vdwg.mxu0
  %v665 = vadd.f32 %v640, %v663
  %667 = vset.pattern.permute.xlu0 0
  %668 = vperm.xlu0 %667, %v594
  %v669 = vpop.permute.xlu0 %668
  %v671 = vadd.f32 %v665, %v669
  %672 = vst [vmem:[#allocation2 + $0x18] sm:$0xff] %v671
  %v673 = vld [vmem:[#allocation2] sm:$0xf]
  %674 = vst.msk [vmem:[%s4] sm:$0xf] %vm19, %v673
  %v675 = vld [vmem:[#allocation2 + $0x8] sm:$0xff]
  %676 = vst.msk [vmem:[%s4 + $0x4] sm:$0xff] %vm324, %v675
  %v677 = vld [vmem:[#allocation2 + $0x10] sm:$0xff]
  %678 = vst.msk [vmem:[%s4 + $0xc] sm:$0xff] %vm324, %v677
  %v679 = vld [vmem:[#allocation2 + $0x18] sm:$0xff]
  %680 = vst.msk [vmem:[%s4 + $0x14] sm:$0xff] %vm324, %v679
  %v681 = vld [vmem:[#allocation2] sm:$0xf]
  %683 = vrot.lane.b32.xlu0 %v681, 112
  %v684 = vpop.permute.xlu0 %683
  %s686 = scalar_lea.vmem %s4, 32
  %687 = vst.msk [vmem:[%s686] sm:$0xf] %vm19, %v684
  %v688 = vld [vmem:[#allocation2 + $0x8] sm:$0xff]
  %690 = vrot.lane.b32.xlu0 %v688, 112
  %v691 = vpop.permute.xlu0 %690
  %693 = vst.msk [vmem:[%s686 + $0x4] sm:$0xff] %vm324, %v691
  %v694 = vld [vmem:[#allocation2 + $0x10] sm:$0xff]
  %696 = vrot.lane.b32.xlu0 %v694, 112
  %v697 = vpop.permute.xlu0 %696
  %699 = vst.msk [vmem:[%s686 + $0xc] sm:$0xff] %vm324, %v697
  %v700 = vld [vmem:[#allocation2 + $0x18] sm:$0xff]
  %702 = vrot.lane.b32.xlu0 %v700, 112
  %v703 = vpop.permute.xlu0 %702
  %705 = vst.msk [vmem:[%s686 + $0x14] sm:$0xff] %vm324, %v703
  // Predicated region
  $region18: #{tpu_custom_call.1} parent=0 // pred_check
    _
  $region19: #{tpu_custom_call.1} parent=0 // pred_check_branch
    %707 = sbr.rel (0) target = $region21
  $region20: #{tpu_custom_call.1} parent=0 // pred_region
    _
  $region21: #{tpu_custom_call.1} parent=0 // pred_fallthru
    _
  // Predicated region
  $region22: #{tpu_custom_call.1} parent=0 // pred_check
    _
  $region23: #{tpu_custom_call.1} parent=0 // pred_check_branch
    %709 = sbr.rel (0) target = $region25
  $region24: #{tpu_custom_call.1} parent=0 // pred_region
    _
  $region25: #{tpu_custom_call.1} parent=0 // pred_fallthru
    _

</llo_original>
